<compile_context>
chip_gen: v6e
topology: v6e:2x2x1
jax: 0.10.0
libtpu: 0.0.40
codegen_flags: <defaults>
</compile_context>

<pallas_src>
import math
from functools import partial

import jax
import jax.numpy as jnp
from jax.experimental import pallas as pl
from jax.experimental.pallas import tpu as pltpu

_LANE = 128
_SUBLANE = 8


def _round_up(a, b):
    return (a + b - 1) // b * b


def _vmem_capacity_bytes():
    """Per-TensorCore VMEM capacity; conservative fallback if the query fails."""
    try:
        cap = getattr(pltpu.get_tpu_info(), "vmem_capacity_bytes", None)
        if cap:
            return int(cap)
    except Exception:
        pass
    return 64 * 1024 * 1024  # v7x-sized (safe on every generation)


def _choose_group(W, n2, Cin, dtype_bytes, max_rhs_bytes=8 * 1024 * 1024):
    """Tokens grouped per matmul row.

    Constraints: g | W, and W//g is either 1 (fully merged row) or a multiple of
    8 (so the in-kernel leading-split reshape and the output block stay tile
    aligned).  Preference: maximal lane density of g*n2 (ideally a multiple of
    128), then the smallest such g (least MXU redundancy / smallest RHS).
    """
    best_key, best_g = None, 1
    for g in range(1, W + 1):
        if W % g:
            continue
        wg = W // g
        if wg != 1 and wg % _SUBLANE != 0:
            continue
        rhs_bytes = (2 * _round_up(g * Cin, _SUBLANE)
                     * _round_up(g * n2, _LANE) * dtype_bytes)
        if rhs_bytes > max_rhs_bytes:
            continue
        key = (math.gcd(g * n2, _LANE), -g)
        if best_key is None or key > best_key:
            best_key, best_g = key, g
    # Fallback g=1 (always correct; may relayout if W % 8 != 0, see kernel note).
    return best_g


def _pick_rows_per_tile(n_rows, wg, per_row_bytes, resident_bytes, budget_bytes):
    """Largest number of image rows per grid step that fits the VMEM budget,
    while keeping enough grid steps for per-core pipelining."""
    sub = _SUBLANE // math.gcd(wg, _SUBLANE)      # rh granularity: rh*wg % 8 == 0
    cap = max(1, (budget_bytes - resident_bytes - (2 << 20)) // max(per_row_bytes, 1))
    cap = max(sub, cap // sub * sub)
    # >= 4 steps when possible (2 per TensorCore on v7x), else >= 2.
    if n_rows >= 4 * sub:
        cap = min(cap, max(sub, (n_rows // 4) // sub * sub))
    elif n_rows >= 2 * sub:
        cap = min(cap, max(sub, (n_rows // 2) // sub * sub))
    cap = min(cap, _round_up(n_rows, sub))
    # Prefer an exact divisor of n_rows (no padded tail) if one is close to cap.
    r = cap
    while r >= sub and 2 * r >= cap:
        if n_rows % r == 0:
            return r
        r -= sub
    return cap


def _upsample_kernel_fused(x_ref, w_ref, b_ref, o_ref):
    """g == W: one fused dot, columns ordered (kh, w, kw, oc) == HBM order.

    x_ref: (rh, W*Cin)          one image row of tokens per sublane row
    w_ref: (W*Cin, 2*W*2*Cout)  block-diag RHS, both kh taps fused
    b_ref: (1, 2*W*2*Cout)      f32 bias
    o_ref: (rh, 2*W*2*Cout)     full output double-rows, lane dense
    """
    acc = jnp.dot(x_ref[...], w_ref[...], preferred_element_type=jnp.float32)
    o_ref[...] = (acc + b_ref[...]).astype(o_ref.dtype)


def _upsample_kernel_split(x_ref, w_ref, b_ref, o_ref, *, rows, wg, gn2):
    """W//g > 1: one dot per kh tap with a block-diagonal RHS.

    x_ref: (rows*wg, g*Cin)     g tokens per sublane row
    w_ref: (2, g*Cin, g*2*Cout) per-kh block-diag RHS, columns (token, kw, oc)
    b_ref: (1, g*2*Cout)        f32 bias
    o_ref: (rows, 2, wg, g*2*Cout)
    """
    x = x_ref[...]
    b = b_ref[...]
    for kh in range(2):          # static unroll: the two output-row taps
        acc = jnp.dot(x, w_ref[kh], preferred_element_type=jnp.float32) + b
        # (rows*wg, gn2) -> (rows, wg, gn2): tile-aligned when wg % 8 == 0
        # (guaranteed by _choose_group; fallback g=1 with odd W is correct but
        #  may relayout). TODO(synk): odd-W fallback keeps the original layout.
        o_ref[:, kh, :, :] = acc.reshape(rows, wg, gn2).astype(o_ref.dtype)


def upsample_forward(x, weight, bias, img_size):
    """ConvTranspose2d(k=2, s=2) upsample.

    x: (B, L, Cin) with L == H*W; weight: (Cin, Cout, 2, 2); bias: (Cout,)
    returns: (B, 4*H*W, Cout)
    """
    B, L, Cin = x.shape
    H, W = img_size
    assert L == H * W, (L, H, W)
    Cout = weight.shape[1]
    n2 = 2 * Cout
    dtype = x.dtype
    dtype_bytes = jnp.dtype(dtype).itemsize

    g = _choose_group(W, n2, Cin, dtype_bytes)
    wg = W // g
    gcin, gn2 = g * Cin, g * n2
    fused = wg == 1

    # Per-kh RHS (Cin, n2) with columns (kw, oc); block-diagonal over the group:
    #   w_bd[kh, gi*Cin+ic, gj*n2 + kw*Cout + oc] = weight[ic, oc, kh, kw] * (gi==gj)
    wk = jnp.transpose(weight, (2, 0, 3, 1)).reshape(2, Cin, n2)
    eye_g = jnp.eye(g, dtype=wk.dtype)
    w_bd = jnp.stack([jnp.kron(eye_g, wk[0]), jnp.kron(eye_g, wk[1])])  # (2,gcin,gn2)

    if fused:
        # Columns ordered (kh, w, kw, oc) == HBM order of one output double-row.
        w_used = jnp.concatenate([w_bd[0], w_bd[1]], axis=1).astype(dtype)
        b_used = jnp.tile(bias, 4 * g).reshape(1, 2 * gn2).astype(jnp.float32)
    else:
        w_used = w_bd.astype(dtype)
        b_used = jnp.tile(bias, 2 * g).reshape(1, gn2).astype(jnp.float32)

    # Generation-aware VMEM sizing (v5e/v6e: 128 MiB/TC, v7x: 64 MiB/TC).
    vmem_cap = _vmem_capacity_bytes()
    if vmem_cap >= 96 * 1024 * 1024:
        vmem_limit, tile_budget = 100 * 1024 * 1024, 64 * 1024 * 1024
    else:
        vmem_limit, tile_budget = 40 * 1024 * 1024, 24 * 1024 * 1024

    x_row = wg * _round_up(gcin, _LANE) * dtype_bytes
    if fused:
        out_row = _round_up(2 * gn2, _LANE) * dtype_bytes
        acc_row = _round_up(2 * gn2, _LANE) * 4
    else:
        out_row = 2 * wg * _round_up(gn2, _LANE) * dtype_bytes
        acc_row = 2 * wg * _round_up(gn2, _LANE) * 4
    per_row = 2 * (x_row + out_row) + acc_row          # double-buffered in/out + f32 acc
    resident = 2 * (w_used.size * dtype_bytes + b_used.size * 4)

    n_rows = B * H                                     # image rows; each holds W tokens
    rh = _pick_rows_per_tile(n_rows, wg, per_row, resident, tile_budget)
    n_tiles = (n_rows + rh - 1) // rh
    n_rows_pad = n_tiles * rh

    # (B, H*W, Cin) is row-major over (b, h, w, ic): free reshapes into the
    # grouped token matrix; padding (if any) is the only extra copy.
    x2 = x.reshape(n_rows, W * Cin)
    if n_rows_pad != n_rows:
        x2 = jnp.pad(x2, ((0, n_rows_pad - n_rows), (0, 0)))
    x2 = x2.reshape(n_rows_pad * wg, gcin)

    tm = rh * wg
    if fused:
        kernel = _upsample_kernel_fused
        out_shape = jax.ShapeDtypeStruct((n_rows_pad, 2 * gn2), dtype)
        out_spec = pl.BlockSpec((rh, 2 * gn2), lambda i: (i, 0))
        w_spec = pl.BlockSpec(w_used.shape, lambda i: (0, 0))      # VMEM-resident
    else:
        kernel = partial(_upsample_kernel_split, rows=rh, wg=wg, gn2=gn2)
        out_shape = jax.ShapeDtypeStruct((n_rows_pad, 2, wg, gn2), dtype)
        out_spec = pl.BlockSpec((rh, 2, wg, gn2), lambda i: (i, 0, 0, 0))
        w_spec = pl.BlockSpec(w_used.shape, lambda i: (0, 0, 0))   # VMEM-resident
    b_spec = pl.BlockSpec(b_used.shape, lambda i: (0, 0))          # VMEM-resident

    cost = pl.CostEstimate(
        flops=2 * B * H * W * Cin * 4 * Cout,
        transcendentals=0,
        bytes_accessed=(x2.size * dtype_bytes
                        + n_rows_pad * 2 * W * n2 * dtype_bytes
                        + w_used.size * dtype_bytes + b_used.size * 4),
    )

    out = pl.pallas_call(
        kernel,
        out_shape=out_shape,
        grid_spec=pltpu.PrefetchScalarGridSpec(
            num_scalar_prefetch=0,
            grid=(n_tiles,),
            in_specs=[pl.BlockSpec((tm, gcin), lambda i: (i, 0)), w_spec, b_spec],
            out_specs=out_spec,
        ),
        compiler_params=pltpu.CompilerParams(
            dimension_semantics=("parallel",),
            vmem_limit_bytes=vmem_limit,
        ),
        cost_estimate=cost,
    )(x2, w_used, b_used)

    if n_rows_pad != n_rows:
        out = out[:n_rows]
    # Row-major (B*H, [kh, w, kw, oc]) == (B, 2H, 2W, Cout): free reshape only.
    return out.reshape(B, 4 * H * W, Cout)


def upsample_reference(x, weight, bias, img_size):
    """Pure-JAX reference implementing ConvTranspose2d(k=2, s=2) semantics."""
    B, L, Cin = x.shape
    H, W = img_size
    Cout = weight.shape[1]
    xi = jnp.transpose(x, (0, 2, 1)).reshape(B, Cin, H, W)
    # out[b, oc, 2h+kh, 2w+kw] = sum_ic xi[b, ic, h, w] * weight[ic, oc, kh, kw] + bias[oc]
    t = jnp.einsum("bihw,iokl->bohkwl", xi, weight)
    t = t.reshape(B, Cout, 2 * H, 2 * W) + bias[None, :, None, None]
    return jnp.transpose(t.reshape(B, Cout, 4 * H * W), (0, 2, 1))


if __name__ == "__main__":
    key = jax.random.PRNGKey(0)
    configs = [
        # (B, H, W, Cin, Cout)
        (2, 8, 8, 4, 8),      # tiny channels -> token-grouped, fused-kh path (g = W)
        (1, 64, 64, 4, 8),    # grouped block-diagonal path (g = 8, W//g = 8)
        (2, 8, 8, 16, 64),    # 2*Cout already lane-dense -> plain path (g = 1)
    ]
    for (B, H, W, Cin, Cout) in configs:
        key, k1, k2, k3 = jax.random.split(key, 4)
        L = H * W
        x = jax.random.normal(k1, (B, L, Cin), dtype=jnp.float32)
        # ConvTranspose2d weight shape: (in_channel, out_channel, 2, 2)
        weight = jax.random.normal(k2, (Cin, Cout, 2, 2), dtype=jnp.float32) * 0.1
        bias = jax.random.normal(k3, (Cout,), dtype=jnp.float32) * 0.1

        out = jax.block_until_ready(upsample_forward(x, weight, bias, (H, W)))
        ref = upsample_reference(x, weight, bias, (H, W))
        assert out.shape == (B, 4 * H * W, Cout), out.shape
        assert jnp.allclose(out, ref, atol=1e-4, rtol=1e-4), \
            f"mismatch vs reference for config {(B, H, W, Cin, Cout)}"

    print("KERNEL_OK")
</pallas_src>

<mosaic_0001>
module attributes {stable_mosaic.version = 11 : i64} {
  func.func @_upsample_kernel_fused(%arg0: i32, %arg1: memref<8x32xf32, #tpu.memory_space<vmem>>, %arg2: memref<32x256xf32, #tpu.memory_space<vmem>>, %arg3: memref<1x256xf32, #tpu.memory_space<vmem>>, %arg4: memref<8x256xf32, #tpu.memory_space<vmem>>) attributes {dimension_semantics = [#tpu.dimension_semantics<parallel>], iteration_bounds = array<i64: 2>, scalar_prefetch = 0 : i64, scratch_operands = 0 : i64, tpu.core_type = #tpu.core_type<tc>, window_params = [{transform_indices = @transform_0, window_bounds = array<i64: 8, 32>}, {pipeline_mode = #tpu.pipeline_mode<synchronous>, transform_indices = @transform_1, window_bounds = array<i64: 32, 256>}, {pipeline_mode = #tpu.pipeline_mode<synchronous>, transform_indices = @transform_2, window_bounds = array<i64: 1, 256>}, {transform_indices = @transform_3, window_bounds = array<i64: 8, 256>}]} {
    %c0 = arith.constant 0 : index
    %c0_0 = arith.constant 0 : index
    %0 = vector.load %arg1[%c0, %c0_0] : memref<8x32xf32, #tpu.memory_space<vmem>>, vector<8x32xf32>
    %c0_1 = arith.constant 0 : index
    %c0_2 = arith.constant 0 : index
    %1 = vector.load %arg2[%c0_1, %c0_2] : memref<32x256xf32, #tpu.memory_space<vmem>>, vector<32x256xf32>
    %cst = arith.constant dense<0.000000e+00> : vector<8x256xf32>
    %2 = tpu.matmul %0, %1, %cst {dimension_numbers = #tpu.dot_dimension_numbers<[1], [0], [0], [1], [0, 0, 1, 1], [], []>} : vector<8x32xf32>, vector<32x256xf32>, vector<8x256xf32> -> vector<8x256xf32>
    %c0_3 = arith.constant 0 : index
    %c0_4 = arith.constant 0 : index
    %3 = vector.load %arg3[%c0_3, %c0_4] : memref<1x256xf32, #tpu.memory_space<vmem>>, vector<1x256xf32>
    %4 = vector.broadcast %3 : vector<1x256xf32> to vector<8x256xf32>
    %5 = arith.addf %2, %4 : vector<8x256xf32>
    %c0_5 = arith.constant 0 : index
    %c0_6 = arith.constant 0 : index
    %6 = vector.load %arg4[%c0_5, %c0_6] : memref<8x256xf32, #tpu.memory_space<vmem>>, vector<8x256xf32>
    tpu.vector_store %arg4[%c0_5, %c0_6], %5 {strides = array<i32>} : memref<8x256xf32, #tpu.memory_space<vmem>>, vector<8x256xf32>,
    return
  }
  func.func @transform_0(%arg0: i32) -> (i32, i32) {
    %c0_i32 = arith.constant 0 : i32
    %c0_i32_0 = arith.constant 0 : i32
    return %arg0, %c0_i32 : i32, i32
  }
  func.func @transform_1(%arg0: i32) -> (i32, i32) {
    %c0_i32 = arith.constant 0 : i32
    %c0_i32_0 = arith.constant 0 : i32
    %c0_i32_1 = arith.constant 0 : i32
    return %c0_i32, %c0_i32_0 : i32, i32
  }
  func.func @transform_2(%arg0: i32) -> (i32, i32) {
    %c0_i32 = arith.constant 0 : i32
    %c0_i32_0 = arith.constant 0 : i32
    %c0_i32_1 = arith.constant 0 : i32
    return %c0_i32, %c0_i32_0 : i32, i32
  }
  func.func @transform_3(%arg0: i32) -> (i32, i32) {
    %c0_i32 = arith.constant 0 : i32
    %c0_i32_0 = arith.constant 0 : i32
    return %arg0, %c0_i32 : i32, i32
  }
}

</mosaic_0001>

<llo_original>
// kernel: tpu_custom_call.1
$region0: #{tpu_custom_call.1}
  #allocation0 [shape = 'u32[]', space=smem, size = 0x4, offset = 0x4, fixed_abs, tag = 'smem constant byte address 0x4 - core index']
  #allocation1 [shape = 'u32[144,128]{1,0:T(1,128)}', space=vmem, size = 0x12000, scoped, tag = 'internal scratch']
  %s0 = inlined_call_operand.hbm [shape: f32[16,32], index: 0, kind: input, shape index: {}]
  %s1 = inlined_call_operand.hbm [shape: f32[32,256], index: 1, kind: input, shape index: {}]
  %s2 = inlined_call_operand.vmem [shape: f32[1,256], index: 2, kind: input, shape index: {}]
  %s3 = inlined_call_operand.hbm [shape: f32[16,256], index: 3, kind: output, shape index: {}]
  %s4 = sld [smem:[#allocation0]]
  $region53: #{tpu_custom_call.1} parent=0
    _
  %s6 = ssub.s32 1, %s4
  %s7 = scalar_select 0, %s6, %s4
  $region1: #{tpu_custom_call.1} parent=0
    #allocation2 [shape = 'u8[8192]{0}', space=vmem, size = 0x2000, scoped, tag = 'input window, operand 0']
    #allocation3 [shape = 's32[2]{0}', space=sflag, size = 0x8, scoped, tag = 'scoped memory for tpu_custom_call.1']
    #allocation4 [shape = 's32[2]{0}', space=sflag, size = 0x8, scoped, tag = 'scoped memory for tpu_custom_call.1']
    #allocation5 [shape = 'u8[32768]{0}', space=vmem, size = 0x8000, scoped, tag = 'input window, operand 1, single buffered']
    #allocation6 [shape = 's32[1]{0}', space=sflag, size = 0x4, scoped, tag = 'scoped memory for tpu_custom_call.1']
    #allocation7 [shape = 'u8[16384]{0}', space=vmem, size = 0x4000, scoped, tag = 'output window, operand 0']
    %8 = vsyncpa [#allocation3], 0
    %s9 = scalar_lea.sflag [#allocation3], 1
    %10 = vsyncpa %s9, 0
    %11 = vsyncpa [#allocation6], 0
    %12 = vsyncpa [#allocation4], 0
    %s13 = scalar_lea.sflag [#allocation4], 1
    %14 = vsyncpa %s13, 0
    loop: start=0, step=1, limit=4
    $region2: #{tpu_custom_call.1} parent=1 // loop_pre_header
      _
    $region3: #{tpu_custom_call.1} parent=1 // loop_header
      %s16 = sphi 0, %s20
      %p17 = scmp.ge.s32.totalorder %s16, 4
      %s26 = sphi 0, %s28
      %s29 = sphi 0, %s26
      %s30 = sphi 0, %s29
      %s46 = sphi 0, %s30
      %s50 = sphi 0, %s50
      %s52 = sphi 0, %s50
      %s53 = sphi 0, %s52
      %s67 = sphi 0, %s53
      %s71 = sphi 0, %s71
      %s73 = sphi 0, %s71
      %s74 = sphi 0, %s73
      %s88 = sphi 0, %s74
      %s94 = sphi 0, %s96
      %s97 = sphi 0, %s94
      %s98 = sphi 0, %s97
      %s114 = sphi 0, %s98
    $region4: #{tpu_custom_call.1} parent=1 // loop_header_branch
      %19 = sbr.rel (%p17) target = $region8
    $region5: #{tpu_custom_call.1} parent=1 // loop_body
      %s21 = ssub.s32 %s16, 1
      %s22 = ssub.s32 %s16, 2
      %s23 = sadd.s32 %s16, 1
      %s24 = ssub.s32 %s16, %s23
      %p25 = scmp.eq.s32.totalorder %s24, 0
      %s27 = sadd.s32 %s26, 1
      %s28 = scalar_select %p25, %s26, %s27
      %p31 = pneg %p25
      %p32 = scmp.eq.s32.totalorder %s16, 1
      %p33 = por %p31, %p32
      %p34 = scmp.ne.s32.totalorder %s26, %s29
      %p35 = scmp.eq.s32.totalorder %s16, 0
      %p36 = por %p34, %p35
      %p37 = scmp.ne.s32.totalorder %s26, %s29
      %p38 = scmp.eq.s32.totalorder %s21, 1
      %p39 = por %p37, %p38
      %p40 = scmp.ne.s32.totalorder %s29, %s30
      %p41 = scmp.eq.s32.totalorder %s21, 0
      %p42 = por %p40, %p41
      %p43 = scmp.ne.s32.totalorder %s29, %s30
      %p44 = scmp.eq.s32.totalorder %s22, 1
      %p45 = por %p43, %p44
      %p47 = scmp.ne.s32.totalorder %s30, %s46
      %p48 = scmp.eq.s32.totalorder %s22, 0
      %p49 = por %p47, %p48
      %s51 = sadd.s32 %s50, 1
      %p54 = scmp.eq.s32.totalorder %s16, 1
      %p55 = scmp.ne.s32.totalorder %s50, %s52
      %p56 = scmp.eq.s32.totalorder %s16, 0
      %p57 = por %p55, %p56
      %p58 = scmp.ne.s32.totalorder %s50, %s52
      %p59 = scmp.eq.s32.totalorder %s21, 1
      %p60 = por %p58, %p59
      %p61 = scmp.ne.s32.totalorder %s52, %s53
      %p62 = scmp.eq.s32.totalorder %s21, 0
      %p63 = por %p61, %p62
      %p64 = scmp.ne.s32.totalorder %s52, %s53
      %p65 = scmp.eq.s32.totalorder %s22, 1
      %p66 = por %p64, %p65
      %p68 = scmp.ne.s32.totalorder %s53, %s67
      %p69 = scmp.eq.s32.totalorder %s22, 0
      %p70 = por %p68, %p69
      %s72 = sadd.s32 %s71, 1
      %p75 = scmp.eq.s32.totalorder %s16, 1
      %p76 = scmp.ne.s32.totalorder %s71, %s73
      %p77 = scmp.eq.s32.totalorder %s16, 0
      %p78 = por %p76, %p77
      %p79 = scmp.ne.s32.totalorder %s71, %s73
      %p80 = scmp.eq.s32.totalorder %s21, 1
      %p81 = por %p79, %p80
      %p82 = scmp.ne.s32.totalorder %s73, %s74
      %p83 = scmp.eq.s32.totalorder %s21, 0
      %p84 = por %p82, %p83
      %p85 = scmp.ne.s32.totalorder %s73, %s74
      %p86 = scmp.eq.s32.totalorder %s22, 1
      %p87 = por %p85, %p86
      %p89 = scmp.ne.s32.totalorder %s74, %s88
      %p90 = scmp.eq.s32.totalorder %s22, 0
      %p91 = por %p89, %p90
      %s92 = ssub.s32 %s16, %s23
      %p93 = scmp.eq.s32.totalorder %s92, 0
      %s95 = sadd.s32 %s94, 1
      %s96 = scalar_select %p93, %s94, %s95
      %p99 = pneg %p93
      %p100 = scmp.eq.s32.totalorder %s16, 1
      %p101 = por %p99, %p100
      %p102 = scmp.ne.s32.totalorder %s94, %s97
      %p103 = scmp.eq.s32.totalorder %s16, 0
      %p104 = por %p102, %p103
      %p105 = scmp.ne.s32.totalorder %s94, %s97
      %p106 = scmp.eq.s32.totalorder %s21, 1
      %p107 = por %p105, %p106
      %p108 = scmp.ne.s32.totalorder %s97, %s98
      %p109 = scmp.eq.s32.totalorder %s21, 0
      %p110 = por %p108, %p109
      %p111 = scmp.ne.s32.totalorder %s97, %s98
      %p112 = scmp.eq.s32.totalorder %s22, 1
      %p113 = por %p111, %p112
      %p115 = scmp.ne.s32.totalorder %s98, %s114
      %p116 = scmp.eq.s32.totalorder %s22, 0
      %p117 = por %p115, %p116
      %p118 = scmp.le.s32.totalorder 1, %s16
      %p119 = scmp.lt.s32.totalorder %s16, 3
      %p120 = pnand %p118, %p119
      %p121 = pneg %p120
      // Predicated region
      $region9: #{tpu_custom_call.1} parent=5 // pred_check
        _
      $region10: #{tpu_custom_call.1} parent=5 // pred_check_branch
        %123 = sbr.rel (%p120) target = $region12
      $region11: #{tpu_custom_call.1} parent=5 // pred_region
        %s124 = ssub.s32 %s16, 1
        // Predicated region
        $region13: #{tpu_custom_call.1} parent=11 // pred_check
          %p125 = pneg %p63
        $region14: #{tpu_custom_call.1} parent=11 // pred_check_branch
          %127 = sbr.rel (%p125) target = $region16
        $region15: #{tpu_custom_call.1} parent=11 // pred_region
          %s129 = ssub.s32 1024, 1024
          %130 = vsyncadd [#allocation6], %s129
          %s131 = sshll.u32 [#allocation5], 4
          %s132 = int_to_ptr.vmem [resolvable:$true] %s131
          %137 = dma.hbm_to_vmem [thread:$0]  %s1, 1024, %s132, [#allocation6], 256, 256, 16
        $region16: #{tpu_custom_call.1} parent=11 // pred_fallthru
          _
        // Predicated region
        $region17: #{tpu_custom_call.1} parent=11 // pred_check
          %p138 = pneg %p84
        $region18: #{tpu_custom_call.1} parent=11 // pred_check_branch
          %140 = sbr.rel (%p138) target = $region20
        $region19: #{tpu_custom_call.1} parent=11 // pred_region
          _
        $region20: #{tpu_custom_call.1} parent=11 // pred_fallthru
          _
      $region12: #{tpu_custom_call.1} parent=5 // pred_fallthru
        _
      %p141 = scmp.lt.s32.totalorder %s16, 2
      // Predicated region
      $region21: #{tpu_custom_call.1} parent=5 // pred_check
        %p142 = pneg %p141
      $region22: #{tpu_custom_call.1} parent=5 // pred_check_branch
        %144 = sbr.rel (%p142) target = $region24
      $region23: #{tpu_custom_call.1} parent=5 // pred_region
        // Predicated region
        $region25: #{tpu_custom_call.1} parent=23 // pred_check
          %p145 = pneg %p36
        $region26: #{tpu_custom_call.1} parent=23 // pred_check_branch
          %147 = sbr.rel (%p145) target = $region28
        $region27: #{tpu_custom_call.1} parent=23 // pred_region
          %s148 = sand.u32 %s26, 1
          %s149 = scalar_lea.sflag [#allocation3], %s148
          %s150 = sand.u32 %s26, 1
          %s151 = smul.addr %s150, 8
          %s152 = scalar_lea.vmem [#allocation2], %s151
          %s154 = ssub.s32 128, 128
          %155 = vsyncadd %s149, %s154
          %s156 = smul.addr %s16, 128
          %s157 = scalar_lea.hbm %s0, %s156
          %s159 = sshll.u32 %s152, 4
          %s160 = int_to_ptr.vmem [resolvable:$true] %s159
          %162 = dma.hbm_to_vmem [thread:$0]  %s157, 128, %s160, %s149
        $region28: #{tpu_custom_call.1} parent=23 // pred_fallthru
          _
      $region24: #{tpu_custom_call.1} parent=5 // pred_fallthru
        _
      %p163 = scmp.le.s32.totalorder 1, %s16
      %p164 = scmp.lt.s32.totalorder %s16, 3
      %p165 = pnand %p163, %p164
      %p166 = pneg %p165
      // Predicated region
      $region29: #{tpu_custom_call.1} parent=5 // pred_check
        _
      $region30: #{tpu_custom_call.1} parent=5 // pred_check_branch
        %168 = sbr.rel (%p165) target = $region32
      $region31: #{tpu_custom_call.1} parent=5 // pred_region
        %s169 = ssub.s32 %s16, 1
        %s170 = sand.u32 %s29, 1
        %s171 = scalar_lea.sflag [#allocation3], %s170
        %s172 = sand.u32 %s29, 1
        %s173 = smul.addr %s172, 8
        %s174 = scalar_lea.vmem [#allocation2], %s173
        // Predicated region
        $region33: #{tpu_custom_call.1} parent=31 // pred_check
          %p175 = pneg %p42
        $region34: #{tpu_custom_call.1} parent=31 // pred_check_branch
          %177 = sbr.rel (%p175) target = $region36
        $region35: #{tpu_custom_call.1} parent=31 // pred_region
          %178 = dma.done %s171, 128
        $region36: #{tpu_custom_call.1} parent=31 // pred_fallthru
          _
        // Predicated region
        $region37: #{tpu_custom_call.1} parent=31 // pred_check
          %p179 = pneg %p63
        $region38: #{tpu_custom_call.1} parent=31 // pred_check_branch
          %181 = sbr.rel (%p179) target = $region40
        $region39: #{tpu_custom_call.1} parent=31 // pred_region
          %182 = dma.done [#allocation6], 1024
        $region40: #{tpu_custom_call.1} parent=31 // pred_fallthru
          _
        %s183 = sand.u32 %s29, 1
        %s184 = scalar_lea.sflag [#allocation3], %s183
        %s185 = sand.u32 %s29, 1
        %s186 = smul.addr %s185, 8
        %s187 = scalar_lea.vmem [#allocation2], %s186
        %p188 = pneg %p42
        %p189 = pneg %p39
        %p190 = pneg %p63
        %p191 = pneg %p60
        %p192 = pneg %p84
        %p193 = pneg %p81
        %p194 = pneg %p110
        %p195 = pneg %p107
        %s196 = sand.u32 %s97, 1
        %s197 = scalar_lea.sflag [#allocation4], %s196
        %s198 = sand.u32 %s97, 1
        %s199 = smul.addr %s198, 16
        %s200 = scalar_lea.vmem [#allocation7], %s199
        %v201 = vld [vmem:[%s174] sm:$0xff]
        %v202 = vld [vmem:[#allocation5] sm:$0xff]
        %v203 = vld [vmem:[#allocation5 + $0x8] sm:$0xff]
        %v204 = vld [vmem:[#allocation5 + $0x10] sm:$0xff]
        %v205 = vld [vmem:[#allocation5 + $0x18] sm:$0xff]
        %v206 = vld [vmem:[#allocation5 + $0x20] sm:$0xff]
        %v207 = vld [vmem:[#allocation5 + $0x28] sm:$0xff]
        %v208 = vld [vmem:[#allocation5 + $0x30] sm:$0xff]
        %v209 = vld [vmem:[#allocation5 + $0x38] sm:$0xff]
        %v210 = vld [vmem:[%s2] sm:$0x3]
        %v212 = vlaneseq
        %v213 = vshrl.u32 %v212, 7
        %v214 = vsub.s32 0, %v213
        %v215 = vrot.slane %v210, %v214
        %v216 = vlaneseq
        %v217 = vshrl.u32 %v216, 7
        %v218 = vsub.s32 1, %v217
        %v219 = vrot.slane %v210, %v218
        %vm222 = vcmask 261120
        %v224 = vsel %vm222, %v201, 0
        %226 = vmatprep.subr.mxu0 0.0
        %227 = vmatpush1.msra.mxu0 0.0
        %228 = vmatprep.subr.mxu0 0.0
        %229 = vmatpush1.msra.mxu0 0.0
        %230 = vmatprep.subr.mxu0 0.0
        %231 = vmatpush1.msra.mxu0 0.0
        %232 = vmatprep.subr.mxu0 0.0
        %233 = vmatpush1.msra.mxu0 0.0
        %234 = vmatprep.subr.mxu0 0.0
        %235 = vmatpush1.msra.mxu0 0.0
        %236 = vmatprep.subr.mxu0 0.0
        %237 = vmatpush1.msra.mxu0 0.0
        %238 = vmatprep.subr.mxu0 0.0
        %239 = vmatpush1.msra.mxu0 0.0
        %240 = vmatprep.subr.mxu0 0.0
        %241 = vmatpush1.msra.mxu0 0.0
        %242 = vmatprep.subr.mxu0 0.0
        %243 = vmatpush1.msra.mxu0 0.0
        %244 = vmatprep.subr.mxu0 0.0
        %245 = vmatpush1.msra.mxu0 0.0
        %246 = vmatprep.subr.mxu0 0.0
        %247 = vmatpush1.msra.mxu0 0.0
        %248 = vmatprep.subr.mxu0 0.0
        %249 = vmatpush1.msra.mxu0 0.0
        %250 = vmatprep.subr.mxu0 %v209
        %251 = vmatpush1.msra.mxu0 %v208
        %252 = vmatprep.subr.mxu0 %v207
        %253 = vmatpush1.msra.mxu0 %v206
        %254 = vmatprep.subr.mxu0 %v205
        %255 = vmatpush1.msra.mxu0 %v204
        %256 = vmatprep.subr.mxu0 %v203
        %257 = vmatpush1.msra.mxu0 %v202
        %258 = vmatprep.subr.mxu0 0.0
        %259 = vmatpush2.msra.mxu0 0.0
        %260 = vmatprep.subr.mxu0 0.0
        %261 = vmatpush2.msra.mxu0 0.0
        %262 = vmatprep.subr.mxu0 0.0
        %263 = vmatpush2.msra.mxu0 0.0
        %264 = vmatprep.subr.mxu0 0.0
        %265 = vmatpush2.msra.mxu0 0.0
        %266 = vmatprep.subr.mxu0 0.0
        %267 = vmatpush2.msra.mxu0 0.0
        %268 = vmatprep.subr.mxu0 0.0
        %269 = vmatpush2.msra.mxu0 0.0
        %270 = vmatprep.subr.mxu0 0.0
        %271 = vmatpush2.msra.mxu0 0.0
        %272 = vmatprep.subr.mxu0 0.0
        %273 = vmatpush2.msra.mxu0 0.0
        %274 = vmatprep.subr.mxu0 0.0
        %275 = vmatpush2.msra.mxu0 0.0
        %276 = vmatprep.subr.mxu0 0.0
        %277 = vmatpush2.msra.mxu0 0.0
        %278 = vmatprep.subr.mxu0 0.0
        %279 = vmatpush2.msra.mxu0 0.0
        %280 = vmatprep.subr.mxu0 0.0
        %281 = vmatpush2.msra.mxu0 0.0
        %282 = vmatprep.subr.mxu0 0.0
        %283 = vmatpush2.msra.mxu0 0.0
        %284 = vmatprep.subr.mxu0 0.0
        %285 = vmatpush2.msra.mxu0 0.0
        %286 = vmatprep.subr.mxu0 0.0
        %287 = vmatpush2.msra.mxu0 0.0
        %288 = vmatprep.subr.mxu0 0.0
        %289 = vmatpush2.msra.mxu0 0.0
        %290 = vmatprep.mubr.f32.mxu0 0.0
        %291 = vmatmul.mubr.f32.gmra.mxu0 %v224
        %v292 = vpop.f32.mrf.mxu0
        %v293 = vadd.f32 %v215, %v292
        %v294 = vpop.f32.mrf.mxu0
        %v295 = vadd.f32 %v219, %v294
        %296 = vdwg.mxu0
        %297 = vst [vmem:[%s200] sm:$0xff] %v293
        %298 = vst [vmem:[%s200 + $0x8] sm:$0xff] %v295
        %s299 = sand.u32 %s97, 1
        %s300 = scalar_lea.sflag [#allocation4], %s299
        %s301 = sand.u32 %s97, 1
        %s302 = smul.addr %s301, 16
        %s303 = scalar_lea.vmem [#allocation7], %s302
        // Predicated region
        $region41: #{tpu_custom_call.1} parent=31 // pred_check
          %p304 = pneg %p107
        $region42: #{tpu_custom_call.1} parent=31 // pred_check_branch
          %306 = sbr.rel (%p304) target = $region44
        $region43: #{tpu_custom_call.1} parent=31 // pred_region
          %s308 = ssub.s32 256, 256
          %309 = vsyncadd %s300, %s308
          %s310 = smul.addr %s21, 2
          %s311 = smul.addr %s310, 128
          %s312 = scalar_lea.hbm %s3, %s311
          %s314 = sshll.u32 %s303, 4
          %s315 = int_to_ptr.vmem [resolvable:$true] %s314
          %317 = dma.vmem_to_hbm [thread:$0]  %s315, 256, %s312, %s300
        $region44: #{tpu_custom_call.1} parent=31 // pred_fallthru
          _
      $region32: #{tpu_custom_call.1} parent=5 // pred_fallthru
        _
      %p318 = scmp.le.s32.totalorder 2, %s16
      // Predicated region
      $region45: #{tpu_custom_call.1} parent=5 // pred_check
        %p319 = pneg %p318
      $region46: #{tpu_custom_call.1} parent=5 // pred_check_branch
        %321 = sbr.rel (%p319) target = $region48
      $region47: #{tpu_custom_call.1} parent=5 // pred_region
        %s322 = ssub.s32 %s16, 2
        // Predicated region
        $region49: #{tpu_custom_call.1} parent=47 // pred_check
          %p323 = pneg %p113
        $region50: #{tpu_custom_call.1} parent=47 // pred_check_branch
          %325 = sbr.rel (%p323) target = $region52
        $region51: #{tpu_custom_call.1} parent=47 // pred_region
          %s326 = sand.u32 %s98, 1
          %s327 = scalar_lea.sflag [#allocation4], %s326
          %s328 = sand.u32 %s98, 1
          %s329 = smul.addr %s328, 16
          %s330 = scalar_lea.vmem [#allocation7], %s329
          %331 = dma.done %s327, 256
        $region52: #{tpu_custom_call.1} parent=47 // pred_fallthru
          _
      $region48: #{tpu_custom_call.1} parent=5 // pred_fallthru
        _
    $region6: #{tpu_custom_call.1} parent=1 // loop_footer
      %s20 = sadd.s32 1, %s16
    $region7: #{tpu_custom_call.1} parent=1 // loop_footer_branch
      %15 = sbr.rel target = $region3
    $region8: #{tpu_custom_call.1} parent=1 // loop_exit
      _
    %332 = vsyncpa [#allocation3], 1
    %s333 = scalar_lea.sflag [#allocation3], 1
    %334 = vsyncpa %s333, 1
    %335 = vsyncpa [#allocation6], 1
    %336 = vsyncpa [#allocation4], 1
    %s337 = scalar_lea.sflag [#allocation4], 1
    %338 = vsyncpa %s337, 1

</llo_original>
